<compile_context>
chip_gen: v5e
topology: v5e:2x2
jax: 0.10.0
libtpu: 0.0.40
codegen_flags: <defaults>
</compile_context>

<pallas_src>
import math
from functools import partial

import jax
import jax.numpy as jnp
from jax import lax
from jax.experimental import pallas as pl
from jax.experimental.pallas import tpu as pltpu

# Large-negative finite "-inf": exp() underflows to exactly 0 and avoids any
# inf-inf arithmetic in the online-softmax rescale.  Safe because kv tile 0 is
# always processed first and contains an unmasked column for every row.
_MASK_VALUE = -1e30


# ---------------------------------------------------------------------------
# Stage 1: per-head Q/K/V projection (Q pre-scaled by 1/sqrt(Dh)).
# ---------------------------------------------------------------------------
def _qkv_proj_kernel(x_ref, wq_ref, wk_ref, wv_ref, q_ref, k_ref, v_ref, *, scale):
    x = x_ref[0]                                              # (ts, d_in)
    q = jnp.dot(x, wq_ref[0], preferred_element_type=jnp.float32) * scale
    k = jnp.dot(x, wk_ref[0], preferred_element_type=jnp.float32)
    v = jnp.dot(x, wv_ref[0], preferred_element_type=jnp.float32)
    q_ref[0, 0] = q.astype(q_ref.dtype)
    k_ref[0, 0] = k.astype(k_ref.dtype)
    v_ref[0, 0] = v.astype(v_ref.dtype)


# ---------------------------------------------------------------------------
# Stage 2: flash attention with online softmax (causal).
# ---------------------------------------------------------------------------
def _flash_kernel(q_ref, k_ref, v_ref, o_ref, m_scr, l_scr, acc_scr, *, tq, tk):
    qi = pl.program_id(2)
    kv = pl.program_id(3)
    n_kv = pl.num_programs(3)
    q_start = qi * tq
    kv_start = kv * tk

    # ---- per-(b, h, q-tile) init -------------------------------------------
    @pl.when(kv == 0)
    def _():
        m_scr[...] = jnp.full_like(m_scr, _MASK_VALUE)
        l_scr[...] = jnp.zeros_like(l_scr)
        acc_scr[...] = jnp.zeros_like(acc_scr)

    def scores():
        # (tq, tk), contracting the head dim directly (no k.T transpose).
        return lax.dot_general(q_ref[0, 0], k_ref[0, 0],
                               (((1,), (1,)), ((), ())),
                               preferred_element_type=jnp.float32)

    def online_softmax_update(s):
        m_prev = m_scr[...]
        m_new = jnp.maximum(m_prev, jnp.max(s, axis=-1, keepdims=True))
        alpha = jnp.exp(m_prev - m_new)
        p = jnp.exp(s - m_new)
        l_scr[...] = alpha * l_scr[...] + jnp.sum(p, axis=-1, keepdims=True)
        acc_scr[...] = alpha * acc_scr[...] + jnp.dot(
            p.astype(v_ref.dtype), v_ref[0, 0], preferred_element_type=jnp.float32)
        m_scr[...] = m_new

    # Tile classification: fully below diagonal (no mask needed), straddling
    # the diagonal (mask needed), or fully above (skipped: no compute; the
    # clamped index_map also avoids the DMA).
    below_diag = kv_start + (tk - 1) <= q_start
    on_diag = jnp.logical_and(kv_start <= q_start + (tq - 1),
                              kv_start + (tk - 1) > q_start)

    @pl.when(below_diag)
    def _():
        online_softmax_update(scores())

    @pl.when(on_diag)
    def _():
        s = scores()
        row = q_start + lax.broadcasted_iota(jnp.int32, (tq, tk), 0)
        col = kv_start + lax.broadcasted_iota(jnp.int32, (tq, tk), 1)
        online_softmax_update(jnp.where(col > row, _MASK_VALUE, s))

    # ---- finalize: exact normalization, single cast, single store ----------
    @pl.when(kv == n_kv - 1)
    def _():
        o_ref[0, 0] = (acc_scr[...] / l_scr[...]).astype(o_ref.dtype)


# ---------------------------------------------------------------------------
# Stage 3: head-concat + output projection + bias (head is the reduction axis).
# ---------------------------------------------------------------------------
def _out_proj_kernel(ctx_ref, wo_ref, bo_ref, out_ref, acc_scr):
    h = pl.program_id(2)
    n_h = pl.num_programs(2)

    @pl.when(h == 0)
    def _():
        acc_scr[...] = jnp.zeros_like(acc_scr)

    acc_scr[...] += jnp.dot(ctx_ref[0, 0], wo_ref[0],
                            preferred_element_type=jnp.float32)

    @pl.when(h == n_h - 1)
    def _():
        out_ref[0] = (acc_scr[...] + bo_ref[...]).astype(out_ref.dtype)


def _pick_tile(S: int) -> int:
    for t in (512, 256, 128):
        if S % t == 0:
            return t
    return S  # small / odd sequences: one full-sequence tile


def multi_head_attention(x, wq, wk, wv, wo, bo, *, num_heads: int,
                         tq: int | None = None, tk: int | None = None):
    """x: (B, S, d_in); wq/wk/wv: (d_in, d_out); wo: (d_out, d_out); bo: (1, d_out)."""
    B, S, d_in = x.shape
    d_out = wq.shape[1]
    assert d_out % num_heads == 0
    H = num_heads
    Dh = d_out // H
    dtype = x.dtype

    tq = _pick_tile(S) if tq is None else tq
    tk = tq if tk is None else tk
    assert S % tq == 0 and S % tk == 0
    n_q, n_kv = S // tq, S // tk

    # Per-head weight layout, done once outside the kernels (layout plumbing).
    wq_h = wq.reshape(d_in, H, Dh).transpose(1, 0, 2)   # (H, d_in, Dh)
    wk_h = wk.reshape(d_in, H, Dh).transpose(1, 0, 2)
    wv_h = wv.reshape(d_in, H, Dh).transpose(1, 0, 2)
    wo_h = wo.reshape(H, Dh, d_out)                      # (H, Dh, d_out)

    scale = 1.0 / math.sqrt(Dh)

    # ---- Stage 1: Q/K/V projection (computed exactly once) ------------------
    qkv_shape = jax.ShapeDtypeStruct((B, H, S, Dh), dtype)
    q, k, v = pl.pallas_call(
        partial(_qkv_proj_kernel, scale=scale),
        out_shape=(qkv_shape, qkv_shape, qkv_shape),
        grid_spec=pltpu.PrefetchScalarGridSpec(
            num_scalar_prefetch=0,
            grid=(B, n_q, H),                                    # head innermost:
            in_specs=[                                           # x fetched once per (b, s-tile)
                pl.BlockSpec((1, tq, d_in), lambda b, si, h: (b, si, 0)),
                pl.BlockSpec((1, d_in, Dh), lambda b, si, h: (h, 0, 0)),
                pl.BlockSpec((1, d_in, Dh), lambda b, si, h: (h, 0, 0)),
                pl.BlockSpec((1, d_in, Dh), lambda b, si, h: (h, 0, 0)),
            ],
            out_specs=(
                pl.BlockSpec((1, 1, tq, Dh), lambda b, si, h: (b, h, si, 0)),
                pl.BlockSpec((1, 1, tq, Dh), lambda b, si, h: (b, h, si, 0)),
                pl.BlockSpec((1, 1, tq, Dh), lambda b, si, h: (b, h, si, 0)),
            ),
        ),
        compiler_params=pltpu.CompilerParams(
            dimension_semantics=("parallel", "parallel", "arbitrary")),
    )(x, wq_h, wk_h, wv_h)

    # ---- Stage 2: flash attention -------------------------------------------
    def q_map(b, h, qi, kv):
        return (b, h, qi, 0)

    def kv_map(b, h, qi, kv):
        # Clamp at the causal diagonal so skipped (above-diagonal) kv tiles
        # reuse the previous block index -> no redundant DMA.
        kv_last = (qi * tq + (tq - 1)) // tk
        return (b, h, jnp.minimum(kv, kv_last), 0)

    ctx = pl.pallas_call(
        partial(_flash_kernel, tq=tq, tk=tk),
        out_shape=jax.ShapeDtypeStruct((B, H, S, Dh), dtype),
        grid_spec=pltpu.PrefetchScalarGridSpec(
            num_scalar_prefetch=0,
            grid=(B, H, n_q, n_kv),
            in_specs=[
                pl.BlockSpec((1, 1, tq, Dh), q_map),
                pl.BlockSpec((1, 1, tk, Dh), kv_map),
                pl.BlockSpec((1, 1, tk, Dh), kv_map),
            ],
            out_specs=pl.BlockSpec((1, 1, tq, Dh), q_map),
            scratch_shapes=[
                pltpu.VMEM((tq, 1), jnp.float32),    # m (running max)
                pltpu.VMEM((tq, 1), jnp.float32),    # l (running denom)
                pltpu.VMEM((tq, Dh), jnp.float32),   # acc (p @ v)
            ],
        ),
        compiler_params=pltpu.CompilerParams(
            dimension_semantics=("parallel", "parallel", "parallel", "arbitrary")),
    )(q, k, v)

    # ---- Stage 3: head-concat + output projection + bias --------------------
    out = pl.pallas_call(
        _out_proj_kernel,
        out_shape=jax.ShapeDtypeStruct((B, S, d_out), dtype),
        grid_spec=pltpu.PrefetchScalarGridSpec(
            num_scalar_prefetch=0,
            grid=(B, n_q, H),                                    # head = reduction axis
            in_specs=[
                pl.BlockSpec((1, 1, tq, Dh), lambda b, qi, h: (b, h, qi, 0)),
                pl.BlockSpec((1, Dh, d_out), lambda b, qi, h: (h, 0, 0)),
                pl.BlockSpec((1, d_out), lambda b, qi, h: (0, 0)),
            ],
            out_specs=pl.BlockSpec((1, tq, d_out), lambda b, qi, h: (b, qi, 0)),
            scratch_shapes=[pltpu.VMEM((tq, d_out), jnp.float32)],
        ),
        compiler_params=pltpu.CompilerParams(
            dimension_semantics=("parallel", "parallel", "arbitrary")),
    )(ctx, wo_h, bo)

    return out


def _reference(x, wq, wk, wv, wo, bo, *, num_heads):
    """Pure-JAX reference mirroring the PyTorch forward."""
    B, S, d_in = x.shape
    d_out = wq.shape[1]
    Dh = d_out // num_heads
    q = (x @ wq).reshape(B, S, num_heads, Dh).transpose(0, 2, 1, 3)
    k = (x @ wk).reshape(B, S, num_heads, Dh).transpose(0, 2, 1, 3)
    v = (x @ wv).reshape(B, S, num_heads, Dh).transpose(0, 2, 1, 3)
    scores = jnp.einsum("bhqd,bhkd->bhqk", q, k)
    mask = jnp.triu(jnp.ones((S, S), bool), k=1)
    scores = jnp.where(mask, -jnp.inf, scores)
    w = jax.nn.softmax(scores / math.sqrt(Dh), axis=-1)
    ctx = jnp.einsum("bhqk,bhkd->bhqd", w, v).transpose(0, 2, 1, 3).reshape(B, S, d_out)
    return ctx @ wo + bo


if __name__ == "__main__":
    # Small deterministic shapes consistent with the module.
    B, S, d_in, d_out, num_heads = 2, 8, 32, 32, 4

    key = jax.random.PRNGKey(0)
    kx, k1, k2, k3, k4, k5 = jax.random.split(key, 6)

    x = jax.random.normal(kx, (B, S, d_in), dtype=jnp.float32)

    # torch.nn.Linear-style uniform init, deterministic via PRNGKey(0).
    bnd_in = 1.0 / math.sqrt(d_in)
    bnd_out = 1.0 / math.sqrt(d_out)
    wq = jax.random.uniform(k1, (d_in, d_out), jnp.float32, -bnd_in, bnd_in)
    wk = jax.random.uniform(k2, (d_in, d_out), jnp.float32, -bnd_in, bnd_in)
    wv = jax.random.uniform(k3, (d_in, d_out), jnp.float32, -bnd_in, bnd_in)
    wo = jax.random.uniform(k4, (d_out, d_out), jnp.float32, -bnd_out, bnd_out)
    bo = jax.random.uniform(k5, (1, d_out), jnp.float32, -bnd_out, bnd_out)

    out = multi_head_attention(x, wq, wk, wv, wo, bo, num_heads=num_heads)
    out = jax.block_until_ready(out)

    ref = _reference(x, wq, wk, wv, wo, bo, num_heads=num_heads)
    assert out.shape == (B, S, d_out)
    # Exact (non-approx) softmax normalization -> tight tolerance.
    assert jnp.allclose(out, ref, atol=2e-3, rtol=2e-3), "mismatch vs reference"

    print("KERNEL_OK")
</pallas_src>

<mosaic_0001>
module attributes {stable_mosaic.version = 11 : i64} {
  func.func @_qkv_proj_kernel(%arg0: i32, %arg1: i32, %arg2: i32, %arg3: memref<1x8x32xf32, #tpu.memory_space<vmem>>, %arg4: memref<1x32x8xf32, #tpu.memory_space<vmem>>, %arg5: memref<1x32x8xf32, #tpu.memory_space<vmem>>, %arg6: memref<1x32x8xf32, #tpu.memory_space<vmem>>, %arg7: memref<1x1x8x8xf32, #tpu.memory_space<vmem>>, %arg8: memref<1x1x8x8xf32, #tpu.memory_space<vmem>>, %arg9: memref<1x1x8x8xf32, #tpu.memory_space<vmem>>) attributes {dimension_semantics = [#tpu.dimension_semantics<parallel>, #tpu.dimension_semantics<parallel>, #tpu.dimension_semantics<arbitrary>], iteration_bounds = array<i64: 2, 1, 4>, scalar_prefetch = 0 : i64, scratch_operands = 0 : i64, tpu.core_type = #tpu.core_type<tc>, window_params = [{transform_indices = @transform_0, window_bounds = array<i64: 1, 8, 32>}, {transform_indices = @transform_1, window_bounds = array<i64: 1, 32, 8>}, {transform_indices = @transform_2, window_bounds = array<i64: 1, 32, 8>}, {transform_indices = @transform_3, window_bounds = array<i64: 1, 32, 8>}, {transform_indices = @transform_4, window_bounds = array<i64: 1, 1, 8, 8>}, {transform_indices = @transform_5, window_bounds = array<i64: 1, 1, 8, 8>}, {transform_indices = @transform_6, window_bounds = array<i64: 1, 1, 8, 8>}]} {
    %c0 = arith.constant 0 : index
    %c0_0 = arith.constant 0 : index
    %c0_1 = arith.constant 0 : index
    %0 = vector.load %arg3[%c0, %c0_0, %c0_1] : memref<1x8x32xf32, #tpu.memory_space<vmem>>, vector<1x8x32xf32>
    %1 = vector.shape_cast %0 : vector<1x8x32xf32> to vector<8x32xf32>
    %c0_2 = arith.constant 0 : index
    %c0_3 = arith.constant 0 : index
    %c0_4 = arith.constant 0 : index
    %2 = vector.load %arg4[%c0_2, %c0_3, %c0_4] : memref<1x32x8xf32, #tpu.memory_space<vmem>>, vector<1x32x8xf32>
    %3 = vector.shape_cast %2 : vector<1x32x8xf32> to vector<32x8xf32>
    %cst = arith.constant dense<0.000000e+00> : vector<8x8xf32>
    %4 = tpu.matmul %1, %3, %cst {dimension_numbers = #tpu.dot_dimension_numbers<[1], [0], [0], [1], [0, 0, 1, 1], [], []>} : vector<8x32xf32>, vector<32x8xf32>, vector<8x8xf32> -> vector<8x8xf32>
    %cst_5 = arith.constant 0.353553385 : f32
    %5 = vector.broadcast %cst_5 : f32 to vector<8x8xf32>
    %6 = arith.mulf %4, %5 : vector<8x8xf32>
    %c0_6 = arith.constant 0 : index
    %c0_7 = arith.constant 0 : index
    %c0_8 = arith.constant 0 : index
    %7 = vector.load %arg5[%c0_6, %c0_7, %c0_8] : memref<1x32x8xf32, #tpu.memory_space<vmem>>, vector<1x32x8xf32>
    %8 = vector.shape_cast %7 : vector<1x32x8xf32> to vector<32x8xf32>
    %cst_9 = arith.constant dense<0.000000e+00> : vector<8x8xf32>
    %9 = tpu.matmul %1, %8, %cst_9 {dimension_numbers = #tpu.dot_dimension_numbers<[1], [0], [0], [1], [0, 0, 1, 1], [], []>} : vector<8x32xf32>, vector<32x8xf32>, vector<8x8xf32> -> vector<8x8xf32>
    %c0_10 = arith.constant 0 : index
    %c0_11 = arith.constant 0 : index
    %c0_12 = arith.constant 0 : index
    %10 = vector.load %arg6[%c0_10, %c0_11, %c0_12] : memref<1x32x8xf32, #tpu.memory_space<vmem>>, vector<1x32x8xf32>
    %11 = vector.shape_cast %10 : vector<1x32x8xf32> to vector<32x8xf32>
    %cst_13 = arith.constant dense<0.000000e+00> : vector<8x8xf32>
    %12 = tpu.matmul %1, %11, %cst_13 {dimension_numbers = #tpu.dot_dimension_numbers<[1], [0], [0], [1], [0, 0, 1, 1], [], []>} : vector<8x32xf32>, vector<32x8xf32>, vector<8x8xf32> -> vector<8x8xf32>
    %c0_14 = arith.constant 0 : index
    %c0_15 = arith.constant 0 : index
    %c0_16 = arith.constant 0 : index
    %c0_17 = arith.constant 0 : index
    %13 = vector.load %arg7[%c0_14, %c0_15, %c0_16, %c0_17] : memref<1x1x8x8xf32, #tpu.memory_space<vmem>>, vector<1x1x8x8xf32>
    %14 = vector.shape_cast %13 : vector<1x1x8x8xf32> to vector<8x8xf32>
    %15 = vector.shape_cast %6 : vector<8x8xf32> to vector<1x1x8x8xf32>
    tpu.vector_store %arg7[%c0_14, %c0_15, %c0_16, %c0_17], %15 {strides = array<i32>} : memref<1x1x8x8xf32, #tpu.memory_space<vmem>>, vector<1x1x8x8xf32>,
    %c0_18 = arith.constant 0 : index
    %c0_19 = arith.constant 0 : index
    %c0_20 = arith.constant 0 : index
    %c0_21 = arith.constant 0 : index
    %16 = vector.load %arg8[%c0_18, %c0_19, %c0_20, %c0_21] : memref<1x1x8x8xf32, #tpu.memory_space<vmem>>, vector<1x1x8x8xf32>
    %17 = vector.shape_cast %16 : vector<1x1x8x8xf32> to vector<8x8xf32>
    %18 = vector.shape_cast %9 : vector<8x8xf32> to vector<1x1x8x8xf32>
    tpu.vector_store %arg8[%c0_18, %c0_19, %c0_20, %c0_21], %18 {strides = array<i32>} : memref<1x1x8x8xf32, #tpu.memory_space<vmem>>, vector<1x1x8x8xf32>,
    %c0_22 = arith.constant 0 : index
    %c0_23 = arith.constant 0 : index
    %c0_24 = arith.constant 0 : index
    %c0_25 = arith.constant 0 : index
    %19 = vector.load %arg9[%c0_22, %c0_23, %c0_24, %c0_25] : memref<1x1x8x8xf32, #tpu.memory_space<vmem>>, vector<1x1x8x8xf32>
    %20 = vector.shape_cast %19 : vector<1x1x8x8xf32> to vector<8x8xf32>
    %21 = vector.shape_cast %12 : vector<8x8xf32> to vector<1x1x8x8xf32>
    tpu.vector_store %arg9[%c0_22, %c0_23, %c0_24, %c0_25], %21 {strides = array<i32>} : memref<1x1x8x8xf32, #tpu.memory_space<vmem>>, vector<1x1x8x8xf32>,
    return
  }
  func.func @transform_0(%arg0: i32, %arg1: i32, %arg2: i32) -> (i32, i32, i32) {
    %c0_i32 = arith.constant 0 : i32
    %c0_i32_0 = arith.constant 0 : i32
    return %arg0, %arg1, %c0_i32 : i32, i32, i32
  }
  func.func @transform_1(%arg0: i32, %arg1: i32, %arg2: i32) -> (i32, i32, i32) {
    %c0_i32 = arith.constant 0 : i32
    %c0_i32_0 = arith.constant 0 : i32
    %c0_i32_1 = arith.constant 0 : i32
    return %arg2, %c0_i32, %c0_i32_0 : i32, i32, i32
  }
  func.func @transform_2(%arg0: i32, %arg1: i32, %arg2: i32) -> (i32, i32, i32) {
    %c0_i32 = arith.constant 0 : i32
    %c0_i32_0 = arith.constant 0 : i32
    %c0_i32_1 = arith.constant 0 : i32
    return %arg2, %c0_i32, %c0_i32_0 : i32, i32, i32
  }
  func.func @transform_3(%arg0: i32, %arg1: i32, %arg2: i32) -> (i32, i32, i32) {
    %c0_i32 = arith.constant 0 : i32
    %c0_i32_0 = arith.constant 0 : i32
    %c0_i32_1 = arith.constant 0 : i32
    return %arg2, %c0_i32, %c0_i32_0 : i32, i32, i32
  }
  func.func @transform_4(%arg0: i32, %arg1: i32, %arg2: i32) -> (i32, i32, i32, i32) {
    %c0_i32 = arith.constant 0 : i32
    %c0_i32_0 = arith.constant 0 : i32
    return %arg0, %arg2, %arg1, %c0_i32 : i32, i32, i32, i32
  }
  func.func @transform_5(%arg0: i32, %arg1: i32, %arg2: i32) -> (i32, i32, i32, i32) {
    %c0_i32 = arith.constant 0 : i32
    %c0_i32_0 = arith.constant 0 : i32
    return %arg0, %arg2, %arg1, %c0_i32 : i32, i32, i32, i32
  }
  func.func @transform_6(%arg0: i32, %arg1: i32, %arg2: i32) -> (i32, i32, i32, i32) {
    %c0_i32 = arith.constant 0 : i32
    %c0_i32_0 = arith.constant 0 : i32
    return %arg0, %arg2, %arg1, %c0_i32 : i32, i32, i32, i32
  }
}

</mosaic_0001>

<llo_original>
// kernel: tpu_custom_call.1
$region0: #{tpu_custom_call.1}
  #allocation0 [shape = 'u32[]', space=smem, size = 0x4, offset = 0x4, fixed_abs, tag = 'smem constant byte address 0x4 - core index']
  #allocation1 [shape = 'u32[72,128]{1,0:T(1,128)}', space=vmem, size = 0x9000, scoped, tag = 'internal scratch']
  %s0 = inlined_call_operand.vmem [shape: f32[2,8,32], index: 0, kind: input, shape index: {}]
  %s1 = inlined_call_operand.vmem [shape: f32[4,32,8], index: 1, kind: input, shape index: {}]
  %s2 = inlined_call_operand.vmem [shape: f32[4,32,8], index: 2, kind: input, shape index: {}]
  %s3 = inlined_call_operand.vmem [shape: f32[4,32,8], index: 3, kind: input, shape index: {}]
  %s4 = inlined_call_operand.hbm [shape: f32[2,4,8,8], index: 4, kind: output, shape index: {0}]
  %s5 = inlined_call_operand.hbm [shape: f32[2,4,8,8], index: 5, kind: output, shape index: {1}]
  %s6 = inlined_call_operand.hbm [shape: f32[2,4,8,8], index: 6, kind: output, shape index: {2}]
  %7 = xla_tuple %s4, %s5, %s6
  %s8 = sld [smem:[#allocation0]]
  $region65: #{tpu_custom_call.1} parent=0
    _
  %s10 = ssub.s32 1, %s8
  %s11 = scalar_select 0, %s10, %s8
  $region1: #{tpu_custom_call.1} parent=0
    #allocation2 [shape = 'u8[8192]{0}', space=vmem, size = 0x2000, scoped, tag = 'output window, operand 0']
    #allocation3 [shape = 's32[2]{0}', space=sflag, size = 0x8, scoped, tag = 'scoped memory for tpu_custom_call.1']
    #allocation4 [shape = 'u8[8192]{0}', space=vmem, size = 0x2000, scoped, tag = 'output window, operand 1']
    #allocation5 [shape = 's32[2]{0}', space=sflag, size = 0x8, scoped, tag = 'scoped memory for tpu_custom_call.1']
    #allocation6 [shape = 'u8[8192]{0}', space=vmem, size = 0x2000, scoped, tag = 'output window, operand 2']
    %12 = vsyncpa [#allocation3], 0
    %s13 = scalar_lea.sflag [#allocation3], 1
    %14 = vsyncpa %s13, 0
    %15 = vsyncpa [#allocation5], 0
    %s16 = scalar_lea.sflag [#allocation5], 1
    %17 = vsyncpa %s16, 0
    loop: start=0, step=1, limit=10
    $region2: #{tpu_custom_call.1} parent=1 // loop_pre_header
      _
    $region3: #{tpu_custom_call.1} parent=1 // loop_header
      %s19 = sphi 0, %s23
      %p20 = scmp.ge.s32.totalorder %s19, 10
      %s26 = sphi 0, %s45
      %s27 = sphi 0, %s41
      %s28 = sphi 0, %s37
      %s29 = sphi 0, %s26
      %s30 = sphi 0, %s27
      %s31 = sphi 0, %s28
      %s32 = sphi 0, %s29
      %s33 = sphi 0, %s30
      %s34 = sphi 0, %s31
      %s50 = sphi 0, %s52
      %s53 = sphi 0, %s50
      %s54 = sphi 0, %s53
      %s70 = sphi 0, %s54
      %s76 = sphi 0, %s78
      %s79 = sphi 0, %s76
      %s80 = sphi 0, %s79
      %s96 = sphi 0, %s80
      %s102 = sphi 0, %s104
      %s105 = sphi 0, %s102
      %s106 = sphi 0, %s105
      %s122 = sphi 0, %s106
      %s128 = sphi 0, %s130
      %s131 = sphi 0, %s128
      %s132 = sphi 0, %s131
      %s148 = sphi 0, %s132
      %s158 = sphi 0, %s160
      %s161 = sphi 0, %s158
      %s162 = sphi 0, %s161
      %s178 = sphi 0, %s162
      %s188 = sphi 0, %s190
      %s191 = sphi 0, %s188
      %s192 = sphi 0, %s191
      %s208 = sphi 0, %s192
      %s218 = sphi 0, %s220
      %s221 = sphi 0, %s218
      %s222 = sphi 0, %s221
      %s238 = sphi 0, %s222
    $region4: #{tpu_custom_call.1} parent=1 // loop_header_branch
      %22 = sbr.rel (%p20) target = $region8
    $region5: #{tpu_custom_call.1} parent=1 // loop_body
      %s24 = ssub.s32 %s19, 1
      %s25 = ssub.s32 %s19, 2
      %s35 = sadd.s32 1, %s28
      %p36 = scmp.ge.s32.totalorder %s35, 4
      %s37 = scalar_select %p36, 0, %s35
      %s38 = sadd.s32 1, %s27
      %s39 = scalar_select %p36, %s38, %s27
      %p40 = scmp.ge.s32.totalorder %s39, 1
      %s41 = scalar_select %p40, 0, %s39
      %s42 = sadd.s32 1, %s26
      %s43 = scalar_select %p40, %s42, %s26
      %p44 = scmp.ge.s32.totalorder %s43, 2
      %s45 = scalar_select %p44, 0, %s43
      %s46 = ssub.s32 %s26, %s45
      %s47 = ssub.s32 %s27, %s41
      %s48 = sor.u32 %s46, %s47
      %p49 = scmp.eq.s32.totalorder %s48, 0
      %s51 = sadd.s32 %s50, 1
      %s52 = scalar_select %p49, %s50, %s51
      %p55 = pneg %p49
      %p56 = scmp.eq.s32.totalorder %s19, 7
      %p57 = por %p55, %p56
      %p58 = scmp.ne.s32.totalorder %s50, %s53
      %p59 = scmp.eq.s32.totalorder %s19, 0
      %p60 = por %p58, %p59
      %p61 = scmp.ne.s32.totalorder %s50, %s53
      %p62 = scmp.eq.s32.totalorder %s24, 7
      %p63 = por %p61, %p62
      %p64 = scmp.ne.s32.totalorder %s53, %s54
      %p65 = scmp.eq.s32.totalorder %s24, 0
      %p66 = por %p64, %p65
      %p67 = scmp.ne.s32.totalorder %s53, %s54
      %p68 = scmp.eq.s32.totalorder %s25, 7
      %p69 = por %p67, %p68
      %p71 = scmp.ne.s32.totalorder %s54, %s70
      %p72 = scmp.eq.s32.totalorder %s25, 0
      %p73 = por %p71, %p72
      %s74 = ssub.s32 %s28, %s37
      %p75 = scmp.eq.s32.totalorder %s74, 0
      %s77 = sadd.s32 %s76, 1
      %s78 = scalar_select %p75, %s76, %s77
      %p81 = pneg %p75
      %p82 = scmp.eq.s32.totalorder %s19, 7
      %p83 = por %p81, %p82
      %p84 = scmp.ne.s32.totalorder %s76, %s79
      %p85 = scmp.eq.s32.totalorder %s19, 0
      %p86 = por %p84, %p85
      %p87 = scmp.ne.s32.totalorder %s76, %s79
      %p88 = scmp.eq.s32.totalorder %s24, 7
      %p89 = por %p87, %p88
      %p90 = scmp.ne.s32.totalorder %s79, %s80
      %p91 = scmp.eq.s32.totalorder %s24, 0
      %p92 = por %p90, %p91
      %p93 = scmp.ne.s32.totalorder %s79, %s80
      %p94 = scmp.eq.s32.totalorder %s25, 7
      %p95 = por %p93, %p94
      %p97 = scmp.ne.s32.totalorder %s80, %s96
      %p98 = scmp.eq.s32.totalorder %s25, 0
      %p99 = por %p97, %p98
      %s100 = ssub.s32 %s28, %s37
      %p101 = scmp.eq.s32.totalorder %s100, 0
      %s103 = sadd.s32 %s102, 1
      %s104 = scalar_select %p101, %s102, %s103
      %p107 = pneg %p101
      %p108 = scmp.eq.s32.totalorder %s19, 7
      %p109 = por %p107, %p108
      %p110 = scmp.ne.s32.totalorder %s102, %s105
      %p111 = scmp.eq.s32.totalorder %s19, 0
      %p112 = por %p110, %p111
      %p113 = scmp.ne.s32.totalorder %s102, %s105
      %p114 = scmp.eq.s32.totalorder %s24, 7
      %p115 = por %p113, %p114
      %p116 = scmp.ne.s32.totalorder %s105, %s106
      %p117 = scmp.eq.s32.totalorder %s24, 0
      %p118 = por %p116, %p117
      %p119 = scmp.ne.s32.totalorder %s105, %s106
      %p120 = scmp.eq.s32.totalorder %s25, 7
      %p121 = por %p119, %p120
      %p123 = scmp.ne.s32.totalorder %s106, %s122
      %p124 = scmp.eq.s32.totalorder %s25, 0
      %p125 = por %p123, %p124
      %s126 = ssub.s32 %s28, %s37
      %p127 = scmp.eq.s32.totalorder %s126, 0
      %s129 = sadd.s32 %s128, 1
      %s130 = scalar_select %p127, %s128, %s129
      %p133 = pneg %p127
      %p134 = scmp.eq.s32.totalorder %s19, 7
      %p135 = por %p133, %p134
      %p136 = scmp.ne.s32.totalorder %s128, %s131
      %p137 = scmp.eq.s32.totalorder %s19, 0
      %p138 = por %p136, %p137
      %p139 = scmp.ne.s32.totalorder %s128, %s131
      %p140 = scmp.eq.s32.totalorder %s24, 7
      %p141 = por %p139, %p140
      %p142 = scmp.ne.s32.totalorder %s131, %s132
      %p143 = scmp.eq.s32.totalorder %s24, 0
      %p144 = por %p142, %p143
      %p145 = scmp.ne.s32.totalorder %s131, %s132
      %p146 = scmp.eq.s32.totalorder %s25, 7
      %p147 = por %p145, %p146
      %p149 = scmp.ne.s32.totalorder %s132, %s148
      %p150 = scmp.eq.s32.totalorder %s25, 0
      %p151 = por %p149, %p150
      %s152 = ssub.s32 %s26, %s45
      %s153 = ssub.s32 %s28, %s37
      %s154 = sor.u32 %s152, %s153
      %s155 = ssub.s32 %s27, %s41
      %s156 = sor.u32 %s154, %s155
      %p157 = scmp.eq.s32.totalorder %s156, 0
      %s159 = sadd.s32 %s158, 1
      %s160 = scalar_select %p157, %s158, %s159
      %p163 = pneg %p157
      %p164 = scmp.eq.s32.totalorder %s19, 7
      %p165 = por %p163, %p164
      %p166 = scmp.ne.s32.totalorder %s158, %s161
      %p167 = scmp.eq.s32.totalorder %s19, 0
      %p168 = por %p166, %p167
      %p169 = scmp.ne.s32.totalorder %s158, %s161
      %p170 = scmp.eq.s32.totalorder %s24, 7
      %p171 = por %p169, %p170
      %p172 = scmp.ne.s32.totalorder %s161, %s162
      %p173 = scmp.eq.s32.totalorder %s24, 0
      %p174 = por %p172, %p173
      %p175 = scmp.ne.s32.totalorder %s161, %s162
      %p176 = scmp.eq.s32.totalorder %s25, 7
      %p177 = por %p175, %p176
      %p179 = scmp.ne.s32.totalorder %s162, %s178
      %p180 = scmp.eq.s32.totalorder %s25, 0
      %p181 = por %p179, %p180
      %s182 = ssub.s32 %s26, %s45
      %s183 = ssub.s32 %s28, %s37
      %s184 = sor.u32 %s182, %s183
      %s185 = ssub.s32 %s27, %s41
      %s186 = sor.u32 %s184, %s185
      %p187 = scmp.eq.s32.totalorder %s186, 0
      %s189 = sadd.s32 %s188, 1
      %s190 = scalar_select %p187, %s188, %s189
      %p193 = pneg %p187
      %p194 = scmp.eq.s32.totalorder %s19, 7
      %p195 = por %p193, %p194
      %p196 = scmp.ne.s32.totalorder %s188, %s191
      %p197 = scmp.eq.s32.totalorder %s19, 0
      %p198 = por %p196, %p197
      %p199 = scmp.ne.s32.totalorder %s188, %s191
      %p200 = scmp.eq.s32.totalorder %s24, 7
      %p201 = por %p199, %p200
      %p202 = scmp.ne.s32.totalorder %s191, %s192
      %p203 = scmp.eq.s32.totalorder %s24, 0
      %p204 = por %p202, %p203
      %p205 = scmp.ne.s32.totalorder %s191, %s192
      %p206 = scmp.eq.s32.totalorder %s25, 7
      %p207 = por %p205, %p206
      %p209 = scmp.ne.s32.totalorder %s192, %s208
      %p210 = scmp.eq.s32.totalorder %s25, 0
      %p211 = por %p209, %p210
      %s212 = ssub.s32 %s26, %s45
      %s213 = ssub.s32 %s28, %s37
      %s214 = sor.u32 %s212, %s213
      %s215 = ssub.s32 %s27, %s41
      %s216 = sor.u32 %s214, %s215
      %p217 = scmp.eq.s32.totalorder %s216, 0
      %s219 = sadd.s32 %s218, 1
      %s220 = scalar_select %p217, %s218, %s219
      %p223 = pneg %p217
      %p224 = scmp.eq.s32.totalorder %s19, 7
      %p225 = por %p223, %p224
      %p226 = scmp.ne.s32.totalorder %s218, %s221
      %p227 = scmp.eq.s32.totalorder %s19, 0
      %p228 = por %p226, %p227
      %p229 = scmp.ne.s32.totalorder %s218, %s221
      %p230 = scmp.eq.s32.totalorder %s24, 7
      %p231 = por %p229, %p230
      %p232 = scmp.ne.s32.totalorder %s221, %s222
      %p233 = scmp.eq.s32.totalorder %s24, 0
      %p234 = por %p232, %p233
      %p235 = scmp.ne.s32.totalorder %s221, %s222
      %p236 = scmp.eq.s32.totalorder %s25, 7
      %p237 = por %p235, %p236
      %p239 = scmp.ne.s32.totalorder %s222, %s238
      %p240 = scmp.eq.s32.totalorder %s25, 0
      %p241 = por %p239, %p240
      %p242 = scmp.le.s32.totalorder 1, %s19
      %p243 = scmp.lt.s32.totalorder %s19, 9
      %p244 = pnand %p242, %p243
      %p245 = pneg %p244
      // Predicated region
      $region9: #{tpu_custom_call.1} parent=5 // pred_check
        _
      $region10: #{tpu_custom_call.1} parent=5 // pred_check_branch
        %247 = sbr.rel (%p244) target = $region12
      $region11: #{tpu_custom_call.1} parent=5 // pred_region
        %s248 = ssub.s32 %s19, 1
      $region12: #{tpu_custom_call.1} parent=5 // pred_fallthru
        _
      %p249 = scmp.lt.s32.totalorder %s19, 8
      // Predicated region
      $region13: #{tpu_custom_call.1} parent=5 // pred_check
        %p250 = pneg %p249
      $region14: #{tpu_custom_call.1} parent=5 // pred_check_branch
        %252 = sbr.rel (%p250) target = $region16
      $region15: #{tpu_custom_call.1} parent=5 // pred_region
        // Predicated region
        $region17: #{tpu_custom_call.1} parent=15 // pred_check
          %p253 = pneg %p60
        $region18: #{tpu_custom_call.1} parent=15 // pred_check_branch
          %255 = sbr.rel (%p253) target = $region20
        $region19: #{tpu_custom_call.1} parent=15 // pred_region
          %p256 = scmp.lt.s32.totalorder %s26, 1
          %s257 = scalar_select %p256, %s26, 1
          %p258 = scmp.lt.s32.totalorder %s27, 0
          %s259 = scalar_select %p258, %s27, 0
          %s260 = sadd.s32 %s259, %s257
          %s261 = smul.addr %s260, 8
          %s262 = scalar_lea.vmem %s0, %s261
        $region20: #{tpu_custom_call.1} parent=15 // pred_fallthru
          _
        // Predicated region
        $region21: #{tpu_custom_call.1} parent=15 // pred_check
          %p263 = pneg %p86
        $region22: #{tpu_custom_call.1} parent=15 // pred_check_branch
          %265 = sbr.rel (%p263) target = $region24
        $region23: #{tpu_custom_call.1} parent=15 // pred_region
          %p266 = scmp.lt.s32.totalorder %s28, 3
          %s267 = scalar_select %p266, %s28, 3
          %s268 = smul.addr %s267, 4
          %s269 = smul.addr %s268, 8
          %s270 = scalar_lea.vmem %s1, %s269
        $region24: #{tpu_custom_call.1} parent=15 // pred_fallthru
          _
        // Predicated region
        $region25: #{tpu_custom_call.1} parent=15 // pred_check
          %p271 = pneg %p112
        $region26: #{tpu_custom_call.1} parent=15 // pred_check_branch
          %273 = sbr.rel (%p271) target = $region28
        $region27: #{tpu_custom_call.1} parent=15 // pred_region
          %p274 = scmp.lt.s32.totalorder %s28, 3
          %s275 = scalar_select %p274, %s28, 3
          %s276 = smul.addr %s275, 4
          %s277 = smul.addr %s276, 8
          %s278 = scalar_lea.vmem %s2, %s277
        $region28: #{tpu_custom_call.1} parent=15 // pred_fallthru
          _
        // Predicated region
        $region29: #{tpu_custom_call.1} parent=15 // pred_check
          %p279 = pneg %p138
        $region30: #{tpu_custom_call.1} parent=15 // pred_check_branch
          %281 = sbr.rel (%p279) target = $region32
        $region31: #{tpu_custom_call.1} parent=15 // pred_region
          %p282 = scmp.lt.s32.totalorder %s28, 3
          %s283 = scalar_select %p282, %s28, 3
          %s284 = smul.addr %s283, 4
          %s285 = smul.addr %s284, 8
          %s286 = scalar_lea.vmem %s3, %s285
        $region32: #{tpu_custom_call.1} parent=15 // pred_fallthru
          _
      $region16: #{tpu_custom_call.1} parent=5 // pred_fallthru
        _
      %p287 = scmp.le.s32.totalorder 1, %s19
      %p288 = scmp.lt.s32.totalorder %s19, 9
      %p289 = pnand %p287, %p288
      %p290 = pneg %p289
      // Predicated region
      $region33: #{tpu_custom_call.1} parent=5 // pred_check
        _
      $region34: #{tpu_custom_call.1} parent=5 // pred_check_branch
        %292 = sbr.rel (%p289) target = $region36
      $region35: #{tpu_custom_call.1} parent=5 // pred_region
        %s293 = ssub.s32 %s19, 1
        %p294 = scmp.lt.s32.totalorder %s29, 1
        %s295 = scalar_select %p294, %s29, 1
        %p296 = scmp.lt.s32.totalorder %s30, 0
        %s297 = scalar_select %p296, %s30, 0
        %s298 = sadd.s32 %s297, %s295
        %s299 = smul.addr %s298, 8
        %s300 = scalar_lea.vmem %s0, %s299
        %p301 = pneg %p66
        %p302 = pneg %p63
        %p303 = scmp.lt.s32.totalorder %s31, 3
        %s304 = scalar_select %p303, %s31, 3
        %s305 = smul.addr %s304, 4
        %s306 = smul.addr %s305, 8
        %s307 = scalar_lea.vmem %s1, %s306
        %p308 = pneg %p92
        %p309 = pneg %p89
        %p310 = scmp.lt.s32.totalorder %s31, 3
        %s311 = scalar_select %p310, %s31, 3
        %s312 = smul.addr %s311, 4
        %s313 = smul.addr %s312, 8
        %s314 = scalar_lea.vmem %s2, %s313
        %p315 = pneg %p118
        %p316 = pneg %p115
        %p317 = scmp.lt.s32.totalorder %s31, 3
        %s318 = scalar_select %p317, %s31, 3
        %s319 = smul.addr %s318, 4
        %s320 = smul.addr %s319, 8
        %s321 = scalar_lea.vmem %s3, %s320
        %p322 = pneg %p144
        %p323 = pneg %p141
        %p324 = pneg %p174
        %p325 = pneg %p171
        %s326 = sand.u32 %s161, 1
        %s327 = scalar_lea.sflag [#allocation3], %s326
        %s328 = sand.u32 %s161, 1
        %s329 = smul.addr %s328, 8
        %s330 = scalar_lea.vmem [#allocation2], %s329
        %p331 = pneg %p204
        %p332 = pneg %p201
        %s333 = sand.u32 %s24, 1
        %s334 = scalar_lea.sflag [#allocation5], %s333
        %s335 = sand.u32 %s191, 1
        %s336 = smul.addr %s335, 8
        %s337 = scalar_lea.vmem [#allocation4], %s336
        %p338 = pneg %p234
        %p339 = pneg %p231
        %s340 = sand.u32 %s24, 1
        %s341 = scalar_lea.sflag [#allocation5], %s340
        %s342 = sand.u32 %s221, 1
        %s343 = smul.addr %s342, 8
        %s344 = scalar_lea.vmem [#allocation6], %s343
        %p345 = scmp.lt.s32.totalorder %s29, 1
        %s346 = scalar_select %p345, %s29, 1
        %p347 = scmp.lt.s32.totalorder %s30, 0
        %s348 = scalar_select %p347, %s30, 0
        %s349 = sadd.s32 %s348, %s346
        %s350 = smul.addr %s349, 8
        %s351 = scalar_lea.vmem %s0, %s350
        %p352 = scmp.lt.s32.totalorder %s31, 3
        %s353 = scalar_select %p352, %s31, 3
        %s354 = smul.addr %s353, 4
        %s355 = smul.addr %s354, 8
        %s356 = scalar_lea.vmem %s1, %s355
        %p357 = scmp.lt.s32.totalorder %s31, 3
        %s358 = scalar_select %p357, %s31, 3
        %s359 = smul.addr %s358, 4
        %s360 = smul.addr %s359, 8
        %s361 = scalar_lea.vmem %s2, %s360
        %p362 = scmp.lt.s32.totalorder %s31, 3
        %s363 = scalar_select %p362, %s31, 3
        %s364 = smul.addr %s363, 4
        %s365 = smul.addr %s364, 8
        %s366 = scalar_lea.vmem %s3, %s365
        %v367 = vld [vmem:[%s351] sm:$0xff]
        %v368 = vld [vmem:[%s356] sm:$0xff]
        %v369 = vld [vmem:[%s356 + $0x8] sm:$0xff]
        %v370 = vld [vmem:[%s356 + $0x10] sm:$0xff]
        %v371 = vld [vmem:[%s356 + $0x18] sm:$0xff]
        %vm372 = vcmask 261120
        %v374 = vsel %vm372, %v367, 0
        %376 = vmatpush.msra.mxu0 0.0
        %377 = vmatpush.msra.mxu0 0.0
        %378 = vmatpush.msra.mxu0 0.0
        %379 = vmatpush.msra.mxu0 0.0
        %380 = vmatpush.msra.mxu0 0.0
        %381 = vmatpush.msra.mxu0 0.0
        %382 = vmatpush.msra.mxu0 0.0
        %383 = vmatpush.msra.mxu0 0.0
        %384 = vmatpush.msra.mxu0 0.0
        %385 = vmatpush.msra.mxu0 0.0
        %386 = vmatpush.msra.mxu0 0.0
        %387 = vmatpush.msra.mxu0 0.0
        %388 = vmatpush.msra.mxu0 %v371
        %389 = vmatpush.msra.mxu0 %v370
        %390 = vmatpush.msra.mxu0 %v369
        %391 = vmatpush.msra.mxu0 %v368
        %392 = vmatmul.f32.gmra.mxu0 %v374
        %v393 = vpop.f32.mrf.mxu0
        %v394 = vadd.f32 0.0, %v393
        %395 = vdwg.mxu0
        %v396 = vmul.f32 %v394, 0.35355338
        %v397 = vld [vmem:[%s361] sm:$0xff]
        %v398 = vld [vmem:[%s361 + $0x8] sm:$0xff]
        %v399 = vld [vmem:[%s361 + $0x10] sm:$0xff]
        %v400 = vld [vmem:[%s361 + $0x18] sm:$0xff]
        %401 = vmatpush.msra.mxu0 0.0
        %402 = vmatpush.msra.mxu0 0.0
        %403 = vmatpush.msra.mxu0 0.0
        %404 = vmatpush.msra.mxu0 0.0
        %405 = vmatpush.msra.mxu0 0.0
        %406 = vmatpush.msra.mxu0 0.0
        %407 = vmatpush.msra.mxu0 0.0
        %408 = vmatpush.msra.mxu0 0.0
        %409 = vmatpush.msra.mxu0 0.0
        %410 = vmatpush.msra.mxu0 0.0
        %411 = vmatpush.msra.mxu0 0.0
        %412 = vmatpush.msra.mxu0 0.0
        %413 = vmatpush.msra.mxu0 %v400
        %414 = vmatpush.msra.mxu0 %v399
        %415 = vmatpush.msra.mxu0 %v398
        %416 = vmatpush.msra.mxu0 %v397
        %417 = vmatmul.f32.gmra.mxu0 %v374
        %v418 = vpop.f32.mrf.mxu0
        %v419 = vadd.f32 0.0, %v418
        %420 = vdwg.mxu0
        %v421 = vld [vmem:[%s366] sm:$0xff]
        %v422 = vld [vmem:[%s366 + $0x8] sm:$0xff]
        %v423 = vld [vmem:[%s366 + $0x10] sm:$0xff]
        %v424 = vld [vmem:[%s366 + $0x18] sm:$0xff]
        %425 = vmatpush.msra.mxu0 0.0
        %426 = vmatpush.msra.mxu0 0.0
        %427 = vmatpush.msra.mxu0 0.0
        %428 = vmatpush.msra.mxu0 0.0
        %429 = vmatpush.msra.mxu0 0.0
        %430 = vmatpush.msra.mxu0 0.0
        %431 = vmatpush.msra.mxu0 0.0
        %432 = vmatpush.msra.mxu0 0.0
        %433 = vmatpush.msra.mxu0 0.0
        %434 = vmatpush.msra.mxu0 0.0
        %435 = vmatpush.msra.mxu0 0.0
        %436 = vmatpush.msra.mxu0 0.0
        %437 = vmatpush.msra.mxu0 %v424
        %438 = vmatpush.msra.mxu0 %v423
        %439 = vmatpush.msra.mxu0 %v422
        %440 = vmatpush.msra.mxu0 %v421
        %441 = vmatmul.f32.gmra.mxu0 %v374
        %v442 = vpop.f32.mrf.mxu0
        %v443 = vadd.f32 0.0, %v442
        %444 = vdwg.mxu0
        %vm445 = vcmask 64512
        %446 = vst.msk [vmem:[%s330] sm:$0xff] %vm445, %v396
        %447 = vst.msk [vmem:[%s337] sm:$0xff] %vm445, %v419
        %448 = vst.msk [vmem:[%s344] sm:$0xff] %vm445, %v443
        %s449 = sand.u32 %s161, 1
        %s450 = scalar_lea.sflag [#allocation3], %s449
        %s451 = sand.u32 %s161, 1
        %s452 = smul.addr %s451, 8
        %s453 = scalar_lea.vmem [#allocation2], %s452
        %s454 = sand.u32 %s24, 1
        %s455 = scalar_lea.sflag [#allocation5], %s454
        %s456 = sand.u32 %s191, 1
        %s457 = smul.addr %s456, 8
        %s458 = scalar_lea.vmem [#allocation4], %s457
        %s459 = sand.u32 %s24, 1
        %s460 = scalar_lea.sflag [#allocation5], %s459
        %s461 = sand.u32 %s221, 1
        %s462 = smul.addr %s461, 8
        %s463 = scalar_lea.vmem [#allocation6], %s462
        // Predicated region
        $region37: #{tpu_custom_call.1} parent=35 // pred_check
          %p464 = pneg %p171
        $region38: #{tpu_custom_call.1} parent=35 // pred_check_branch
          %466 = sbr.rel (%p464) target = $region40
        $region39: #{tpu_custom_call.1} parent=35 // pred_region
          %468 = vsyncadd %s450, 0
          %s469 = sadd.s32 %s30, %s31
          %s470 = smul.addr %s29, 4
          %s471 = sadd.s32 %s469, %s470
          %s472 = smul.addr %s471, 8
          %s473 = scalar_lea.hbm %s4, %s472
          %s475 = sshll.u32 %s453, 4
          %s476 = int_to_ptr.vmem [resolvable:$true] %s475
          %s477 = sshll.u32 %s473, 4
          %s478 = int_to_ptr.hbm [resolvable:$true] %s477
          %480 = dma.vmem_to_hbm [thread:$0]  %s476, 128, %s478, %s450
        $region40: #{tpu_custom_call.1} parent=35 // pred_fallthru
          _
        // Predicated region
        $region41: #{tpu_custom_call.1} parent=35 // pred_check
          %p481 = pneg %p201
        $region42: #{tpu_custom_call.1} parent=35 // pred_check_branch
          %483 = sbr.rel (%p481) target = $region44
        $region43: #{tpu_custom_call.1} parent=35 // pred_region
          %485 = vsyncadd %s455, 0
          %s486 = sadd.s32 %s30, %s31
          %s487 = smul.addr %s29, 4
          %s488 = sadd.s32 %s486, %s487
          %s489 = smul.addr %s488, 8
          %s490 = scalar_lea.hbm %s5, %s489
          %s492 = sshll.u32 %s458, 4
          %s493 = int_to_ptr.vmem [resolvable:$true] %s492
          %s494 = sshll.u32 %s490, 4
          %s495 = int_to_ptr.hbm [resolvable:$true] %s494
          %497 = dma.vmem_to_hbm [thread:$0]  %s493, 128, %s495, %s455
        $region44: #{tpu_custom_call.1} parent=35 // pred_fallthru
          _
        // Predicated region
        $region45: #{tpu_custom_call.1} parent=35 // pred_check
          %p498 = pneg %p231
        $region46: #{tpu_custom_call.1} parent=35 // pred_check_branch
          %500 = sbr.rel (%p498) target = $region48
        $region47: #{tpu_custom_call.1} parent=35 // pred_region
          %502 = vsyncadd %s460, 0
          %s503 = sadd.s32 %s30, %s31
          %s504 = smul.addr %s29, 4
          %s505 = sadd.s32 %s503, %s504
          %s506 = smul.addr %s505, 8
          %s507 = scalar_lea.hbm %s6, %s506
          %s509 = sshll.u32 %s463, 4
          %s510 = int_to_ptr.vmem [resolvable:$true] %s509
          %s511 = sshll.u32 %s507, 4
          %s512 = int_to_ptr.hbm [resolvable:$true] %s511
          %514 = dma.vmem_to_hbm [thread:$0]  %s510, 128, %s512, %s460
        $region48: #{tpu_custom_call.1} parent=35 // pred_fallthru
          _
      $region36: #{tpu_custom_call.1} parent=5 // pred_fallthru
        _
      %p515 = scmp.le.s32.totalorder 2, %s19
      // Predicated region
      $region49: #{tpu_custom_call.1} parent=5 // pred_check
        %p516 = pneg %p515
      $region50: #{tpu_custom_call.1} parent=5 // pred_check_branch
        %518 = sbr.rel (%p516) target = $region52
      $region51: #{tpu_custom_call.1} parent=5 // pred_region
        %s519 = ssub.s32 %s19, 2
        // Predicated region
        $region53: #{tpu_custom_call.1} parent=51 // pred_check
          %p520 = pneg %p177
        $region54: #{tpu_custom_call.1} parent=51 // pred_check_branch
          %522 = sbr.rel (%p520) target = $region56
        $region55: #{tpu_custom_call.1} parent=51 // pred_region
          %s523 = sand.u32 %s162, 1
          %s524 = scalar_lea.sflag [#allocation3], %s523
          %s525 = sand.u32 %s162, 1
          %s526 = smul.addr %s525, 8
          %s527 = scalar_lea.vmem [#allocation2], %s526
          %529 = dma.done %s524, 128
        $region56: #{tpu_custom_call.1} parent=51 // pred_fallthru
          _
        // Predicated region
        $region57: #{tpu_custom_call.1} parent=51 // pred_check
          %p530 = pneg %p207
        $region58: #{tpu_custom_call.1} parent=51 // pred_check_branch
          %532 = sbr.rel (%p530) target = $region60
        $region59: #{tpu_custom_call.1} parent=51 // pred_region
          %s533 = sand.u32 %s25, 1
          %s534 = scalar_lea.sflag [#allocation5], %s533
          %s535 = sand.u32 %s192, 1
          %s536 = smul.addr %s535, 8
          %s537 = scalar_lea.vmem [#allocation4], %s536
          %539 = dma.done %s534, 128
        $region60: #{tpu_custom_call.1} parent=51 // pred_fallthru
          _
        // Predicated region
        $region61: #{tpu_custom_call.1} parent=51 // pred_check
          %p540 = pneg %p237
        $region62: #{tpu_custom_call.1} parent=51 // pred_check_branch
          %542 = sbr.rel (%p540) target = $region64
        $region63: #{tpu_custom_call.1} parent=51 // pred_region
          %s543 = sand.u32 %s25, 1
          %s544 = scalar_lea.sflag [#allocation5], %s543
          %s545 = sand.u32 %s222, 1
          %s546 = smul.addr %s545, 8
          %s547 = scalar_lea.vmem [#allocation6], %s546
          %549 = dma.done %s544, 128
        $region64: #{tpu_custom_call.1} parent=51 // pred_fallthru
          _
      $region52: #{tpu_custom_call.1} parent=5 // pred_fallthru
        _
    $region6: #{tpu_custom_call.1} parent=1 // loop_footer
      %s23 = sadd.s32 1, %s19
    $region7: #{tpu_custom_call.1} parent=1 // loop_footer_branch
      %18 = sbr.rel target = $region3
    $region8: #{tpu_custom_call.1} parent=1 // loop_exit
      _
    %550 = vsyncpa [#allocation3], 1
    %s551 = scalar_lea.sflag [#allocation3], 1
    %552 = vsyncpa %s551, 1
    %553 = vsyncpa [#allocation5], 1
    %s554 = scalar_lea.sflag [#allocation5], 1
    %555 = vsyncpa %s554, 1

</llo_original>
